<compile_context>
chip_gen: v7x
topology: tpu7x:2x2x1
jax: 0.10.0
libtpu: 0.0.40
codegen_flags: <defaults>
</compile_context>

<pallas_src>
import functools

import jax
import jax.numpy as jnp
from jax import lax
from jax.experimental import pallas as pl
from jax.experimental.pallas import tpu as pltpu

_LANE = 128
_MiB = 1024 * 1024
_TILE_BYTES = 4 * _MiB          # target per-tile DMA size for the tiled path


def _vmem_budget():
    """Returns (vmem_limit_bytes, max_elements_for_single_block_path)."""
    try:
        cap = pltpu.get_tpu_info().vmem_capacity_bytes
    except Exception:
        cap = 64 * _MiB          # conservative fallback, safe on every generation
    vmem_limit = int((cap * 3) // 4)     # v5e/v6e: 96 MiB, v7x: 48 MiB
    # Single-block path worst case ~ 2x(in + out) double-buffered + f32 temps
    # ~= 24 bytes per element -> v5e/v6e: ~4Mi elems (16 MiB f32), v7x: ~2Mi.
    small_max_elems = int(vmem_limit // 24)
    return vmem_limit, small_max_elems


# --------------------------------------------------------------------------
# Kernels
# --------------------------------------------------------------------------
def _centered_small_kernel(x_ref, o_ref, *, inv_n):
    """Whole (lane-dense) array in one VMEM block: sum + broadcast subtract."""
    x = x_ref[...].astype(jnp.float32)
    col = jnp.sum(x, axis=0, keepdims=True)      # sublane-direction reduce
    mean = jnp.sum(col) * inv_n                  # one XLU reduce, static 1/n
    o_ref[...] = (x - mean).astype(o_ref.dtype)


def _col_sum_kernel(x_ref, colsum_ref, *, tile_rows, rows_total, ragged):
    """Pass 1: accumulate lane-preserving column sums into the output block."""
    i = pl.program_id(0)

    @pl.when(i == 0)
    def _():
        colsum_ref[...] = jnp.zeros_like(colsum_ref)

    x = x_ref[...].astype(jnp.float32)
    if ragged:
        # Only the final (partial) row-tile has rows past `rows_total`; its
        # un-DMA'd region is stale VMEM, so select (not multiply) against a
        # cheap (tile_rows, 1) sublane mask that lane-broadcasts.
        rid = lax.broadcasted_iota(jnp.int32, (tile_rows, 1), 0)
        x = jnp.where(rid < rows_total - i * tile_rows, x, 0.0)
    # Hot loop does only a sublane-direction reduce; the single cross-lane
    # reduce of the (1, cols) result happens once, in the wrapper.
    colsum_ref[...] += jnp.sum(x, axis=0, keepdims=True)


def _subtract_kernel(mean_ref, x_ref, o_ref):
    """Pass 2: broadcast-subtract the mean (f32 scalar read from SMEM)."""
    mean = mean_ref[0, 0]
    o_ref[...] = (x_ref[...].astype(jnp.float32) - mean).astype(o_ref.dtype)


# --------------------------------------------------------------------------
# Wrappers
# --------------------------------------------------------------------------
def _centered_small(flat, dtype, n, inv_n, vmem_limit):
    itemsize = jnp.dtype(dtype).itemsize
    cols = _LANE
    rows = pl.cdiv(n, cols)
    padded = rows * cols != n
    if padded:                                   # tiny inputs only: pad is cheap
        flat = jnp.pad(flat, (0, rows * cols - n))   # zeros do not change the sum
    xp = flat.reshape(rows, cols)                # free bitcast when not padded

    out = pl.pallas_call(
        functools.partial(_centered_small_kernel, inv_n=inv_n),
        out_shape=jax.ShapeDtypeStruct((rows, cols), dtype),
        grid=(1,),
        in_specs=[pl.BlockSpec((rows, cols), lambda i: (0, 0))],
        out_specs=pl.BlockSpec((rows, cols), lambda i: (0, 0)),
        compiler_params=pltpu.CompilerParams(
            dimension_semantics=("arbitrary",),
            vmem_limit_bytes=vmem_limit),
        cost_estimate=pl.CostEstimate(
            flops=2 * n, transcendentals=0, bytes_accessed=2 * n * itemsize),
    )(xp)

    if padded:
        out = out.reshape(-1)[:n]
    return out


def _centered_large(flat, dtype, n, inv_n, vmem_limit):
    itemsize = jnp.dtype(dtype).itemsize

    # Widest lane-dense column count that divides n exactly -> reshape is a
    # free bitcast (no pad copy in, no [:n] slice copy out).
    cols = None
    for c in (512, 256, 128):
        if n % c == 0:
            cols = c
            break
    padded = cols is None
    if padded:
        # Uncommon ragged case (n % 128 != 0): fall back to zero-padding.
        cols = _LANE
        rows = pl.cdiv(n, cols)
        flat = jnp.pad(flat, (0, rows * cols - n))
    else:
        rows = n // cols
    xp = flat.reshape(rows, cols)

    # ~4 MiB per tile regardless of dtype (bf16 gets 2x the rows of f32).
    tile_rows = max(8, _TILE_BYTES // (cols * itemsize))
    grid = (pl.cdiv(rows, tile_rows),)
    ragged_rows = (rows % tile_rows) != 0

    # ---- pass 1: global column sums (sequential accumulator output) ----
    col_sums = pl.pallas_call(
        functools.partial(_col_sum_kernel, tile_rows=tile_rows,
                          rows_total=rows, ragged=ragged_rows),
        out_shape=jax.ShapeDtypeStruct((1, cols), jnp.float32),
        grid=grid,
        in_specs=[pl.BlockSpec((tile_rows, cols), lambda i: (i, 0))],
        out_specs=pl.BlockSpec((1, cols), lambda i: (0, 0)),
        compiler_params=pltpu.CompilerParams(
            dimension_semantics=("arbitrary",),
            vmem_limit_bytes=vmem_limit),
        cost_estimate=pl.CostEstimate(
            flops=n, transcendentals=0,
            bytes_accessed=n * itemsize + cols * 4),
    )(xp)

    # Tiny cross-lane reduce + static 1/n scaling in XLA (512 floats, negligible).
    mean = (jnp.sum(col_sums) * inv_n).astype(jnp.float32).reshape(1, 1)

    # ---- pass 2: broadcast subtract (parallel -> both TCs on v7x) ----
    out = pl.pallas_call(
        _subtract_kernel,
        out_shape=jax.ShapeDtypeStruct((rows, cols), dtype),
        grid=grid,
        in_specs=[
            pl.BlockSpec(memory_space=pltpu.MemorySpace.SMEM),   # mean scalar
            pl.BlockSpec((tile_rows, cols), lambda i: (i, 0)),
        ],
        out_specs=pl.BlockSpec((tile_rows, cols), lambda i: (i, 0)),
        compiler_params=pltpu.CompilerParams(
            dimension_semantics=("parallel",),
            vmem_limit_bytes=vmem_limit),
        cost_estimate=pl.CostEstimate(
            flops=n, transcendentals=0, bytes_accessed=2 * n * itemsize),
    )(mean, xp)

    if padded:
        out = out.reshape(-1)[:n]
    return out


def centered_layer(x: jax.Array) -> jax.Array:
    """x - x.mean() over all elements (CenteredLayer.forward) via Pallas."""
    if not jnp.issubdtype(x.dtype, jnp.floating):
        raise TypeError("CenteredLayer expects a floating-point input")
    if x.dtype not in (jnp.float32, jnp.bfloat16, jnp.float16):
        raise TypeError("CenteredLayer Pallas kernel supports float32/bfloat16/"
                        "float16 only (no native float64 on TPU)")

    orig_shape = x.shape
    n = x.size
    if n == 0:
        return x                       # empty in, empty out
    if x.ndim == 0:
        return x - x                   # scalar: x - mean(x) == 0

    inv_n = 1.0 / n
    vmem_limit, small_max = _vmem_budget()
    flat = x.reshape(-1)               # free bitcast for contiguous arrays

    # NOTE: serial f32 accumulation of per-tile partial sums; fine for typical
    # tolerances, consider pairwise combination for n >> 1e8 at tight tolerance.
    if n <= small_max:
        out = _centered_small(flat, x.dtype, n, inv_n, vmem_limit)
    else:
        out = _centered_large(flat, x.dtype, n, inv_n, vmem_limit)
    return out.reshape(orig_shape)


if __name__ == "__main__":
    key = jax.random.PRNGKey(0)
    k1, k2, k3 = jax.random.split(key, 3)

    def check(x, atol, rtol):
        out = centered_layer(x)
        jax.block_until_ready(out)
        xf = x.astype(jnp.float32)
        ref = (xf - jnp.mean(xf)).astype(x.dtype)
        assert out.shape == x.shape and out.dtype == x.dtype
        assert jnp.allclose(out.astype(jnp.float32), ref.astype(jnp.float32),
                            atol=atol, rtol=rtol), f"mismatch {x.shape} {x.dtype}"

    # Module-consistent row vector (torch.ones(1, 4)): padded single-block path.
    check(jnp.ones((1, 4), jnp.float32), 1e-6, 1e-6)
    # Small 4-D activation-like input: single-block path, n % 128 == 0.
    check(jax.random.normal(k1, (2, 4, 16, 16), dtype=jnp.float32), 1e-5, 1e-5)
    # Tiled two-pass path (f32): no pad, partial last row-tile exercises masking.
    check(jax.random.normal(k2, (2048, 2304), dtype=jnp.float32), 1e-4, 1e-4)
    # Tiled two-pass path (bf16): dtype-aware tile sizing + masking.
    check(jax.random.normal(k3, (2048, 2304)).astype(jnp.bfloat16), 6e-2, 2e-2)

    print("KERNEL_OK")
</pallas_src>

<mosaic_0001>
module attributes {stable_mosaic.version = 11 : i64} {
  func.func @_centered_small_kernel(%arg0: i32, %arg1: memref<1x128xf32, #tpu.memory_space<vmem>>, %arg2: memref<1x128xf32, #tpu.memory_space<vmem>>) attributes {dimension_semantics = [#tpu.dimension_semantics<arbitrary>], iteration_bounds = array<i64: 1>, scalar_prefetch = 0 : i64, scratch_operands = 0 : i64, tpu.core_type = #tpu.core_type<tc>, window_params = [{pipeline_mode = #tpu.pipeline_mode<synchronous>, transform_indices = @transform_0, window_bounds = array<i64: 1, 128>}, {pipeline_mode = #tpu.pipeline_mode<synchronous>, transform_indices = @transform_1, window_bounds = array<i64: 1, 128>}]} {
    %c0 = arith.constant 0 : index
    %c0_0 = arith.constant 0 : index
    %0 = vector.load %arg1[%c0, %c0_0] : memref<1x128xf32, #tpu.memory_space<vmem>>, vector<1x128xf32>
    %cst = arith.constant dense<0.000000e+00> : vector<128xf32>
    %1 = vector.multi_reduction <add>, %0, %cst [0] : vector<1x128xf32> to vector<128xf32>
    %2 = vector.shape_cast %1 : vector<128xf32> to vector<1x128xf32>
    %3 = vector.shape_cast %2 : vector<1x128xf32> to vector<1x1x128xf32>
    %cst_1 = arith.constant dense<0.000000e+00> : vector<1xf32>
    %4 = vector.multi_reduction <add>, %3, %cst_1 [1, 2] : vector<1x1x128xf32> to vector<1xf32>
    %5 = vector.shape_cast %4 : vector<1xf32> to vector<1x1x1xf32>
    %6 = vector.extract %5[0, 0, 0] : f32 from vector<1x1x1xf32>
    %cst_2 = arith.constant 2.500000e-01 : f32
    %7 = arith.mulf %6, %cst_2 : f32
    %8 = vector.broadcast %7 : f32 to vector<1x128xf32>
    %9 = arith.subf %0, %8 : vector<1x128xf32>
    %c0_3 = arith.constant 0 : index
    %c0_4 = arith.constant 0 : index
    %10 = vector.load %arg2[%c0_3, %c0_4] : memref<1x128xf32, #tpu.memory_space<vmem>>, vector<1x128xf32>
    tpu.vector_store %arg2[%c0_3, %c0_4], %9 {strides = array<i32>} : memref<1x128xf32, #tpu.memory_space<vmem>>, vector<1x128xf32>,
    return
  }
  func.func @transform_0(%arg0: i32) -> (i32, i32) {
    %c0_i32 = arith.constant 0 : i32
    %c0_i32_0 = arith.constant 0 : i32
    %c0_i32_1 = arith.constant 0 : i32
    return %c0_i32, %c0_i32_0 : i32, i32
  }
  func.func @transform_1(%arg0: i32) -> (i32, i32) {
    %c0_i32 = arith.constant 0 : i32
    %c0_i32_0 = arith.constant 0 : i32
    %c0_i32_1 = arith.constant 0 : i32
    return %c0_i32, %c0_i32_0 : i32, i32
  }
}

</mosaic_0001>

<llo_original>
// kernel: tpu_custom_call.1
$region0: #{tpu_custom_call.1}
  #allocation0 [shape = 'u32[]', space=smem, size = 0x4, offset = 0x4, fixed_abs, tag = 'smem constant byte address 0x4 - core index']
  #allocation1 [shape = 'u32[144,128]{1,0:T(1,128)}', space=vmem, size = 0x12000, scoped, tag = 'internal scratch']
  %s0 = inlined_call_operand.hbm [shape: f32[1,128], index: 0, kind: input, shape index: {}]
  %s1 = inlined_call_operand.hbm [shape: f32[1,128], index: 1, kind: output, shape index: {}]
  %s2 = sld [smem:[#allocation0]]
  $region18: #{tpu_custom_call.1} parent=0
    _
  %s4 = ssub.s32 1, %s2
  %s5 = scalar_select 0, %s4, %s2
  $region1: #{tpu_custom_call.1} parent=0
    #allocation2 [shape = 'u8[512]{0}', space=vmem, size = 0x400, scoped, tag = 'input window, operand 0, single buffered']
    #allocation3 [shape = 's32[1]{0}', space=sflag, size = 0x4, scoped, tag = 'scoped memory for tpu_custom_call.1']
    #allocation4 [shape = 's32[1]{0}', space=sflag, size = 0x4, scoped, tag = 'scoped memory for tpu_custom_call.1']
    #allocation5 [shape = 'u8[512]{0}', space=vmem, size = 0x400, scoped, tag = 'output window, operand 0, single buffered']
    %6 = vsyncpa [#allocation3], 0
    %7 = vsyncpa [#allocation4], 0
    // Predicated region
    $region2: #{tpu_custom_call.1} parent=1 // pred_check
      _
    $region3: #{tpu_custom_call.1} parent=1 // pred_check_branch
      %9 = sbr.rel (0) target = $region5
    $region4: #{tpu_custom_call.1} parent=1 // pred_region
      %s11 = ssub.s32 16, 16
      %12 = vsyncadd [#allocation3], %s11
      %s14 = sshll.u32 [#allocation2], 4
      %s15 = int_to_ptr.vmem [resolvable:$true] %s14
      %17 = dma.hbm_to_vmem [thread:$0]  %s0, 16, %s15, [#allocation3]
    $region5: #{tpu_custom_call.1} parent=1 // pred_fallthru
      _
    // Predicated region
    $region6: #{tpu_custom_call.1} parent=1 // pred_check
      _
    $region7: #{tpu_custom_call.1} parent=1 // pred_check_branch
      %19 = sbr.rel (0) target = $region9
    $region8: #{tpu_custom_call.1} parent=1 // pred_region
      %20 = dma.done [#allocation3], 16
    $region9: #{tpu_custom_call.1} parent=1 // pred_fallthru
      _
    %v21 = vld [vmem:[#allocation2] sm:$0x1]
    %v22 = vadd.f32 %v21, 0.0
    %vm23 = vcmask 1040384
    %v24 = vsel %vm23, %v22, 0.0
    %25 = vadd.xlane.f32.xlu0 %v24
    %v26 = vpop.xlane.xlu0 %25
    %v27 = vrot.slane %v26, 4
    %v28 = vadd.f32 %v26, %v27
    %v29 = vrot.slane %v28, 2
    %v30 = vadd.f32 %v28, %v29
    %v31 = vrot.slane %v30, 1
    %v32 = vadd.f32 %v30, %v31
    %s33 = vtos %v32
    %s34 = smul.f32 %s33, 0.25
    %v35 = vstv %s34
    %v36 = vsub.f32 %v21, %v35
    %37 = vst [vmem:[#allocation5] sm:$0x1] %v36
    // Predicated region
    $region10: #{tpu_custom_call.1} parent=1 // pred_check
      _
    $region11: #{tpu_custom_call.1} parent=1 // pred_check_branch
      %39 = sbr.rel (0) target = $region13
    $region12: #{tpu_custom_call.1} parent=1 // pred_region
      %s41 = ssub.s32 16, 16
      %42 = vsyncadd [#allocation4], %s41
      %s44 = sshll.u32 [#allocation5], 4
      %s45 = int_to_ptr.vmem [resolvable:$true] %s44
      %47 = dma.vmem_to_hbm [thread:$0]  %s45, 16, %s1, [#allocation4]
    $region13: #{tpu_custom_call.1} parent=1 // pred_fallthru
      _
    // Predicated region
    $region14: #{tpu_custom_call.1} parent=1 // pred_check
      _
    $region15: #{tpu_custom_call.1} parent=1 // pred_check_branch
      %49 = sbr.rel (0) target = $region17
    $region16: #{tpu_custom_call.1} parent=1 // pred_region
      %50 = dma.done [#allocation4], 16
    $region17: #{tpu_custom_call.1} parent=1 // pred_fallthru
      _
    %51 = vsyncpa [#allocation3], 1
    %52 = vsyncpa [#allocation4], 1

</llo_original>
